<compile_context>
chip_gen: v6e
topology: v6e:2x2x1
jax: 0.10.0
libtpu: 0.0.40
codegen_flags: <defaults>
</compile_context>

<pallas_src>
import functools

import jax
import jax.numpy as jnp
from jax import lax
from jax.experimental import pallas as pl
from jax.experimental.pallas import tpu as pltpu


def _diff_loss_kernel(shared_ref, task_ref, out_ref, *, use_gram, use_bf16):
    shared = shared_ref[...].astype(jnp.float32)   # [N, D]
    task = task_ref[...].astype(jnp.float32)       # [N, D]
    d = task.shape[1]

    # Center each matrix along the batch (row) axis: x - mean(x, dim=0).
    task_c = task - jnp.mean(task, axis=0, keepdims=True)
    shared_c = shared - jnp.mean(shared, axis=0, keepdims=True)

    # Row L2-normalize (torch F.normalize, p=2, dim=1, eps=1e-12):
    #   x / max(||x||, eps).
    # The reciprocal is only an [N, 1] divide (N values), so we keep it exact:
    # an EUP approx reciprocal would perturb the final scalar loss.
    eps = jnp.float32(1e-12)
    t_norm = jnp.sqrt(jnp.sum(task_c * task_c, axis=1, keepdims=True))
    s_norm = jnp.sqrt(jnp.sum(shared_c * shared_c, axis=1, keepdims=True))
    task_n = task_c * (jnp.float32(1.0) / jnp.maximum(t_norm, eps))
    shared_n = shared_c * (jnp.float32(1.0) / jnp.maximum(s_norm, eps))

    if use_bf16:
        # Normalized rows are bounded, so bf16 operands + f32 accumulation are
        # numerically safe for a loss that is then squared and averaged.
        task_n = task_n.astype(jnp.bfloat16)
        shared_n = shared_n.astype(jnp.bfloat16)

    if use_gram:
        # Trace-cyclic identity (N <= D):
        #   ||Tn^T Sn||_F^2 = tr(Sn^T Tn Tn^T Sn) = sum((Tn Tn^T) * (Sn Sn^T))
        # Both Grams contract over the feature axis (dim 1) — "NT" matmuls,
        # no transpose materialized, result is only [N, N].
        gram_t = lax.dot_general(
            task_n, task_n, (((1,), (1,)), ((), ())),
            preferred_element_type=jnp.float32)
        gram_s = lax.dot_general(
            shared_n, shared_n, (((1,), (1,)), ((), ())),
            preferred_element_type=jnp.float32)
        sq_sum = jnp.sum(gram_t * gram_s)
    else:
        # Direct path (N > D): contract over the batch axis (dim 0 of both),
        # i.e. Tn^T @ Sn without an explicit transpose in VMEM.
        corr = lax.dot_general(
            task_n, shared_n, (((0,), (0,)), ((), ())),
            preferred_element_type=jnp.float32)
        sq_sum = jnp.sum(corr * corr)

    cost = sq_sum / jnp.float32(d * d) * jnp.float32(0.01)
    # torch.where(cost > 0, cost, 0)
    out_ref[0, 0] = jnp.maximum(cost, jnp.float32(0.0))


def diff_loss(shared_feats: jax.Array, task_feats: jax.Array,
              *, use_bf16_matmul: bool | None = None) -> jax.Array:
    """Pallas implementation of DiffLoss.forward. Returns a scalar float32."""
    assert shared_feats.shape == task_feats.shape
    assert shared_feats.ndim == 2
    n, d = shared_feats.shape

    # Gram-trace path removes the D x D intermediate; pick it whenever the
    # N x N Grams are not larger than the D x D correlation matrix.
    use_gram = n <= d
    if use_bf16_matmul is None:
        # Only worth it when the matmul is big enough to be MXU-bound; keep
        # f32 at small sizes for exact agreement with the reference.
        use_bf16_matmul = (d >= 512 and n >= 16)

    # Single-block kernel: everything must fit in VMEM. Assert a conservative
    # footprint so this fails loudly (v7x has only 64 MiB / 32 MiB scoped).
    in_bytes = 2 * n * d * shared_feats.dtype.itemsize
    work_bytes = 2 * n * d * 4                                  # centered/normalized f32
    res_bytes = (2 * n * n * 4) if use_gram else (d * d * 4)    # Grams or corr
    footprint = in_bytes + work_bytes + res_bytes
    vmem_budget = 40 * 1024 * 1024
    assert footprint <= vmem_budget, (
        f"DiffLoss inputs too large for single-block kernel "
        f"({footprint} B > {vmem_budget} B); a batch-gridded variant is "
        f"required for this size.")

    kernel = functools.partial(
        _diff_loss_kernel, use_gram=use_gram, use_bf16=use_bf16_matmul)

    out = pl.pallas_call(
        kernel,
        out_shape=jax.ShapeDtypeStruct((1, 1), jnp.float32),
        in_specs=[
            pl.BlockSpec(memory_space=pltpu.VMEM),
            pl.BlockSpec(memory_space=pltpu.VMEM),
        ],
        # Scalar loss goes out through SMEM — avoids a masked partial store
        # into a padded (8,128) VMEM tile plus a full-tile HBM writeback.
        out_specs=pl.BlockSpec(memory_space=pltpu.SMEM),
        compiler_params=pltpu.CompilerParams(
            vmem_limit_bytes=48 * 1024 * 1024),
    )(shared_feats, task_feats)
    return out[0, 0]


def _reference(shared_feats, task_feats):
    """Pure-JAX reference for correctness checking (mirrors the PyTorch code)."""
    t = task_feats - jnp.mean(task_feats, axis=0, keepdims=True)
    s = shared_feats - jnp.mean(shared_feats, axis=0, keepdims=True)
    t = t / jnp.maximum(jnp.linalg.norm(t, axis=1, keepdims=True), 1e-12)
    s = s / jnp.maximum(jnp.linalg.norm(s, axis=1, keepdims=True), 1e-12)
    corr = t.T @ s
    cost = jnp.mean(corr ** 2) * 0.01
    return jnp.maximum(cost, 0.0)


if __name__ == "__main__":
    key = jax.random.PRNGKey(0)
    k1, k2, k3, k4 = jax.random.split(key, 4)

    # Case 1: N <= D  ->  Gram-trace path (typical regime for this loss).
    N, D = 8, 32
    shared_feats = jax.random.normal(k1, (N, D), dtype=jnp.float32)
    task_feats = jax.random.normal(k2, (N, D), dtype=jnp.float32)
    cost = jax.block_until_ready(diff_loss(shared_feats, task_feats))
    ref = _reference(shared_feats, task_feats)
    assert jnp.allclose(cost, ref, rtol=1e-5, atol=1e-6), (cost, ref)

    # Case 2: N > D  ->  direct transpose-free D x D path.
    N2, D2 = 64, 32
    shared2 = jax.random.normal(k3, (N2, D2), dtype=jnp.float32)
    task2 = jax.random.normal(k4, (N2, D2), dtype=jnp.float32)
    cost2 = jax.block_until_ready(diff_loss(shared2, task2))
    ref2 = _reference(shared2, task2)
    assert jnp.allclose(cost2, ref2, rtol=1e-5, atol=1e-6), (cost2, ref2)

    print("KERNEL_OK")
</pallas_src>

<mosaic_0001>
module attributes {stable_mosaic.version = 11 : i64} {
  func.func @_diff_loss_kernel(%arg0: memref<8x32xf32, #tpu.memory_space<vmem>>, %arg1: memref<8x32xf32, #tpu.memory_space<vmem>>, %arg2: memref<1x1xf32, #tpu.memory_space<smem>>) attributes {dimension_semantics = [], scalar_prefetch = 0 : i64, scratch_operands = 0 : i64, tpu.core_type = #tpu.core_type<tc>} {
    %c0 = arith.constant 0 : index
    %c0_0 = arith.constant 0 : index
    %0 = vector.load %arg0[%c0, %c0_0] : memref<8x32xf32, #tpu.memory_space<vmem>>, vector<8x32xf32>
    %c0_1 = arith.constant 0 : index
    %c0_2 = arith.constant 0 : index
    %1 = vector.load %arg1[%c0_1, %c0_2] : memref<8x32xf32, #tpu.memory_space<vmem>>, vector<8x32xf32>
    %cst = arith.constant dense<0.000000e+00> : vector<32xf32>
    %2 = vector.multi_reduction <add>, %1, %cst [0] : vector<8x32xf32> to vector<32xf32>
    %3 = vector.shape_cast %2 : vector<32xf32> to vector<1x32xf32>
    %cst_3 = arith.constant 8.000000e+00 : f32
    %4 = vector.broadcast %cst_3 : f32 to vector<1x32xf32>
    %5 = arith.divf %3, %4 : vector<1x32xf32>
    %6 = vector.broadcast %5 : vector<1x32xf32> to vector<8x32xf32>
    %7 = arith.subf %1, %6 : vector<8x32xf32>
    %cst_4 = arith.constant dense<0.000000e+00> : vector<32xf32>
    %8 = vector.multi_reduction <add>, %0, %cst_4 [0] : vector<8x32xf32> to vector<32xf32>
    %9 = vector.shape_cast %8 : vector<32xf32> to vector<1x32xf32>
    %cst_5 = arith.constant 8.000000e+00 : f32
    %10 = vector.broadcast %cst_5 : f32 to vector<1x32xf32>
    %11 = arith.divf %9, %10 : vector<1x32xf32>
    %12 = vector.broadcast %11 : vector<1x32xf32> to vector<8x32xf32>
    %13 = arith.subf %0, %12 : vector<8x32xf32>
    %14 = arith.mulf %7, %7 : vector<8x32xf32>
    %cst_6 = arith.constant dense<0.000000e+00> : vector<8xf32>
    %15 = vector.multi_reduction <add>, %14, %cst_6 [1] : vector<8x32xf32> to vector<8xf32>
    %16 = vector.shape_cast %15 : vector<8xf32> to vector<8x1xf32>
    %17 = math.sqrt %16 : vector<8x1xf32>
    %18 = arith.mulf %13, %13 : vector<8x32xf32>
    %cst_7 = arith.constant dense<0.000000e+00> : vector<8xf32>
    %19 = vector.multi_reduction <add>, %18, %cst_7 [1] : vector<8x32xf32> to vector<8xf32>
    %20 = vector.shape_cast %19 : vector<8xf32> to vector<8x1xf32>
    %21 = math.sqrt %20 : vector<8x1xf32>
    %cst_8 = arith.constant 9.99999996E-13 : f32
    %22 = vector.broadcast %cst_8 : f32 to vector<8x1xf32>
    %23 = arith.maximumf %17, %22 : vector<8x1xf32>
    %cst_9 = arith.constant 1.000000e+00 : f32
    %24 = vector.broadcast %cst_9 : f32 to vector<8x1xf32>
    %25 = arith.divf %24, %23 : vector<8x1xf32>
    %26 = vector.broadcast %25 : vector<8x1xf32> to vector<8x32xf32>
    %27 = arith.mulf %7, %26 : vector<8x32xf32>
    %cst_10 = arith.constant 9.99999996E-13 : f32
    %28 = vector.broadcast %cst_10 : f32 to vector<8x1xf32>
    %29 = arith.maximumf %21, %28 : vector<8x1xf32>
    %cst_11 = arith.constant 1.000000e+00 : f32
    %30 = vector.broadcast %cst_11 : f32 to vector<8x1xf32>
    %31 = arith.divf %30, %29 : vector<8x1xf32>
    %32 = vector.broadcast %31 : vector<8x1xf32> to vector<8x32xf32>
    %33 = arith.mulf %13, %32 : vector<8x32xf32>
    %cst_12 = arith.constant dense<0.000000e+00> : vector<8x8xf32>
    %34 = tpu.matmul %27, %27, %cst_12 {dimension_numbers = #tpu.dot_dimension_numbers<[1], [1], [0], [0], [0, 0, 1, 0], [], []>} : vector<8x32xf32>, vector<8x32xf32>, vector<8x8xf32> -> vector<8x8xf32>
    %cst_13 = arith.constant dense<0.000000e+00> : vector<8x8xf32>
    %35 = tpu.matmul %33, %33, %cst_13 {dimension_numbers = #tpu.dot_dimension_numbers<[1], [1], [0], [0], [0, 0, 1, 0], [], []>} : vector<8x32xf32>, vector<8x32xf32>, vector<8x8xf32> -> vector<8x8xf32>
    %36 = arith.mulf %34, %35 : vector<8x8xf32>
    %37 = vector.shape_cast %36 : vector<8x8xf32> to vector<1x8x8xf32>
    %cst_14 = arith.constant dense<0.000000e+00> : vector<1xf32>
    %38 = vector.multi_reduction <add>, %37, %cst_14 [1, 2] : vector<1x8x8xf32> to vector<1xf32>
    %39 = vector.shape_cast %38 : vector<1xf32> to vector<1x1x1xf32>
    %40 = vector.extract %39[0, 0, 0] : f32 from vector<1x1x1xf32>
    %cst_15 = arith.constant 1.024000e+03 : f32
    %41 = arith.divf %40, %cst_15 : f32
    %cst_16 = arith.constant 0.00999999977 : f32
    %42 = arith.mulf %41, %cst_16 : f32
    %cst_17 = arith.constant 0.000000e+00 : f32
    %43 = arith.maximumf %42, %cst_17 : f32
    %c0_18 = arith.constant 0 : index
    %c0_19 = arith.constant 0 : index
    %44 = memref.load %arg2[%c0_18, %c0_19] : memref<1x1xf32, #tpu.memory_space<smem>>
    memref.store %43, %arg2[%c0_18, %c0_19] : memref<1x1xf32, #tpu.memory_space<smem>>
    return
  }
}

</mosaic_0001>

<llo_original>
// kernel: tpu_custom_call.1
$region0: #{tpu_custom_call.1}
  #allocation0 [shape = 'u32[]', space=smem, size = 0x4, offset = 0x4, fixed_abs, tag = 'smem constant byte address 0x4 - core index']
  #allocation1 [shape = 'u32[144,128]{1,0:T(1,128)}', space=vmem, size = 0x12000, scoped, tag = 'internal scratch']
  %s0 = inlined_call_operand.hbm [shape: f32[8,32], index: 0, kind: input, shape index: {}]
  %s1 = inlined_call_operand.hbm [shape: f32[8,32], index: 1, kind: input, shape index: {}]
  %s2 = inlined_call_operand.hbm [shape: f32[1,1], index: 2, kind: output, shape index: {}]
  %s3 = sld [smem:[#allocation0]]
  $region26: #{tpu_custom_call.1} parent=0
    _
  %s5 = ssub.s32 1, %s3
  %s6 = scalar_select 0, %s5, %s3
  $region1: #{tpu_custom_call.1} parent=0
    #allocation2 [shape = 'u8[4096]{0}', space=vmem, size = 0x1000, scoped, tag = 'input window, operand 0, single buffered']
    #allocation3 [shape = 's32[1]{0}', space=sflag, size = 0x4, scoped, tag = 'scoped memory for tpu_custom_call.1']
    #allocation4 [shape = 's32[1]{0}', space=sflag, size = 0x4, scoped, tag = 'scoped memory for tpu_custom_call.1']
    #allocation5 [shape = 'u8[4096]{0}', space=vmem, size = 0x1000, scoped, tag = 'input window, operand 1, single buffered']
    #allocation6 [shape = 's32[1]{0}', space=sflag, size = 0x4, scoped, tag = 'scoped memory for tpu_custom_call.1']
    #allocation7 [shape = 'u8[512]{0}', space=smem, size = 0x200, scoped, tag = 'output window, operand 0, single buffered']
    %7 = vsyncpa [#allocation3], 0
    %8 = vsyncpa [#allocation6], 0
    %9 = vsyncpa [#allocation4], 0
    // Predicated region
    $region2: #{tpu_custom_call.1} parent=1 // pred_check
      _
    $region3: #{tpu_custom_call.1} parent=1 // pred_check_branch
      %11 = sbr.rel (0) target = $region5
    $region4: #{tpu_custom_call.1} parent=1 // pred_region
      %s13 = ssub.s32 128, 128
      %14 = vsyncadd [#allocation3], %s13
      %s16 = sshll.u32 [#allocation2], 4
      %s17 = int_to_ptr.vmem [resolvable:$true] %s16
      %19 = dma.hbm_to_vmem [thread:$0]  %s0, 128, %s17, [#allocation3]
    $region5: #{tpu_custom_call.1} parent=1 // pred_fallthru
      _
    // Predicated region
    $region6: #{tpu_custom_call.1} parent=1 // pred_check
      _
    $region7: #{tpu_custom_call.1} parent=1 // pred_check_branch
      %21 = sbr.rel (0) target = $region9
    $region8: #{tpu_custom_call.1} parent=1 // pred_region
      %s23 = ssub.s32 128, 128
      %24 = vsyncadd [#allocation6], %s23
      %s26 = sshll.u32 [#allocation5], 4
      %s27 = int_to_ptr.vmem [resolvable:$true] %s26
      %29 = dma.hbm_to_vmem [thread:$0]  %s1, 128, %s27, [#allocation6]
    $region9: #{tpu_custom_call.1} parent=1 // pred_fallthru
      _
    // Predicated region
    $region10: #{tpu_custom_call.1} parent=1 // pred_check
      _
    $region11: #{tpu_custom_call.1} parent=1 // pred_check_branch
      %31 = sbr.rel (0) target = $region13
    $region12: #{tpu_custom_call.1} parent=1 // pred_region
      %32 = dma.done [#allocation3], 128
    $region13: #{tpu_custom_call.1} parent=1 // pred_fallthru
      _
    // Predicated region
    $region14: #{tpu_custom_call.1} parent=1 // pred_check
      _
    $region15: #{tpu_custom_call.1} parent=1 // pred_check_branch
      %34 = sbr.rel (0) target = $region17
    $region16: #{tpu_custom_call.1} parent=1 // pred_region
      %35 = dma.done [#allocation6], 128
    $region17: #{tpu_custom_call.1} parent=1 // pred_fallthru
      _
    %v36 = vld [vmem:[#allocation2] sm:$0xff]
    %v37 = vld [vmem:[#allocation5] sm:$0xff]
    %vm38 = vcmask 261120
    %v39 = vsel %vm38, %v37, 0.0
    %v40 = vrot.slane %v39, 4
    %v41 = vadd.f32 %v39, %v40
    %v42 = vrot.slane %v41, 2
    %v43 = vadd.f32 %v41, %v42
    %v44 = vrot.slane %v43, 1
    %v45 = vadd.f32 %v43, %v44
    %v46 = vrcp.pop 8.0
    %v47 = vmul.f32 %v45, %v46
    %v48 = vsub.f32 %v37, %v47
    %v49 = vsel %vm38, %v36, 0.0
    %v50 = vrot.slane %v49, 4
    %v51 = vadd.f32 %v49, %v50
    %v52 = vrot.slane %v51, 2
    %v53 = vadd.f32 %v51, %v52
    %v54 = vrot.slane %v53, 1
    %v55 = vadd.f32 %v53, %v54
    %v56 = vmul.f32 %v55, %v46
    %v57 = vsub.f32 %v36, %v56
    %v58 = vmul.f32 %v48, %v48
    %v59 = vsel %vm38, %v58, 0.0
    %60 = vadd.xlane.f32.xlu0 %v59
    %v61 = vpop.xlane.xlu0 %60
    %v62 = vrsqrt.pop %v61
    %v63 = vmul.f32 %v61, %v62
    %vm64 = vcmp.eq.f32.partialorder %v61, inf
    %v65 = vsel %vm64, %v61, %v63
    %vm66 = vcmp.eq.f32.partialorder %v61, 0.0
    %v67 = vand.u32 %v61, 2147483648
    %v68 = vsel %vm66, %v67, %v65
    %v69 = vmul.f32 %v57, %v57
    %v70 = vsel %vm38, %v69, 0.0
    %71 = vadd.xlane.f32.xlu0 %v70
    %v72 = vpop.xlane.xlu0 %71
    %v73 = vrsqrt.pop %v72
    %v74 = vmul.f32 %v72, %v73
    %vm75 = vcmp.eq.f32.partialorder %v72, inf
    %v76 = vsel %vm75, %v72, %v74
    %vm77 = vcmp.eq.f32.partialorder %v72, 0.0
    %v78 = vand.u32 %v72, 2147483648
    %v79 = vsel %vm77, %v78, %v76
    %v80 = vmax.f32 %v68, 1e-12
    %v81 = vrcp.pop %v80
    %v82 = vmul.f32 1.0, %v81
    %v83 = vmul.f32 %v48, %v82
    %v84 = vmax.f32 %v79, 1e-12
    %v85 = vrcp.pop %v84
    %v86 = vmul.f32 1.0, %v85
    %v87 = vmul.f32 %v57, %v86
    %v89 = vsel %vm38, %v83, 0
    %91 = vmatprep.subr.mxu0 0.0
    %92 = vmatpush1.xpose.msra.mxu0 0.0
    %93 = vmatprep.subr.mxu0 0.0
    %94 = vmatpush1.xpose.msra.mxu0 0.0
    %95 = vmatprep.subr.mxu0 0.0
    %96 = vmatpush1.xpose.msra.mxu0 0.0
    %97 = vmatprep.subr.mxu0 0.0
    %98 = vmatpush1.xpose.msra.mxu0 0.0
    %99 = vmatprep.subr.mxu0 0.0
    %100 = vmatpush1.xpose.msra.mxu0 0.0
    %101 = vmatprep.subr.mxu0 0.0
    %102 = vmatpush1.xpose.msra.mxu0 0.0
    %103 = vmatprep.subr.mxu0 0.0
    %104 = vmatpush1.xpose.msra.mxu0 0.0
    %105 = vmatprep.subr.mxu0 0.0
    %106 = vmatpush1.xpose.msra.mxu0 0.0
    %107 = vmatprep.subr.mxu0 0.0
    %108 = vmatpush1.xpose.msra.mxu0 0.0
    %109 = vmatprep.subr.mxu0 0.0
    %110 = vmatpush1.xpose.msra.mxu0 0.0
    %111 = vmatprep.subr.mxu0 0.0
    %112 = vmatpush1.xpose.msra.mxu0 0.0
    %113 = vmatprep.subr.mxu0 0.0
    %114 = vmatpush1.xpose.msra.mxu0 0.0
    %115 = vmatprep.subr.mxu0 0.0
    %116 = vmatpush1.xpose.msra.mxu0 0.0
    %117 = vmatprep.subr.mxu0 0.0
    %118 = vmatpush1.xpose.msra.mxu0 0.0
    %119 = vmatprep.subr.mxu0 0.0
    %120 = vmatpush1.xpose.msra.mxu0 0.0
    %121 = vmatprep.subr.mxu0 0.0
    %122 = vmatpush1.xpose.msra.mxu0 %v89
    %123 = vmatprep.subr.mxu0 0.0
    %124 = vmatpush2.xpose.msra.mxu0 0.0
    %125 = vmatprep.subr.mxu0 0.0
    %126 = vmatpush2.xpose.msra.mxu0 0.0
    %127 = vmatprep.subr.mxu0 0.0
    %128 = vmatpush2.xpose.msra.mxu0 0.0
    %129 = vmatprep.subr.mxu0 0.0
    %130 = vmatpush2.xpose.msra.mxu0 0.0
    %131 = vmatprep.subr.mxu0 0.0
    %132 = vmatpush2.xpose.msra.mxu0 0.0
    %133 = vmatprep.subr.mxu0 0.0
    %134 = vmatpush2.xpose.msra.mxu0 0.0
    %135 = vmatprep.subr.mxu0 0.0
    %136 = vmatpush2.xpose.msra.mxu0 0.0
    %137 = vmatprep.subr.mxu0 0.0
    %138 = vmatpush2.xpose.msra.mxu0 0.0
    %139 = vmatprep.subr.mxu0 0.0
    %140 = vmatpush2.xpose.msra.mxu0 0.0
    %141 = vmatprep.subr.mxu0 0.0
    %142 = vmatpush2.xpose.msra.mxu0 0.0
    %143 = vmatprep.subr.mxu0 0.0
    %144 = vmatpush2.xpose.msra.mxu0 0.0
    %145 = vmatprep.subr.mxu0 0.0
    %146 = vmatpush2.xpose.msra.mxu0 0.0
    %147 = vmatprep.subr.mxu0 0.0
    %148 = vmatpush2.xpose.msra.mxu0 0.0
    %149 = vmatprep.subr.mxu0 0.0
    %150 = vmatpush2.xpose.msra.mxu0 0.0
    %151 = vmatprep.subr.mxu0 0.0
    %152 = vmatpush2.xpose.msra.mxu0 0.0
    %153 = vmatprep.subr.mxu0 0.0
    %154 = vmatpush2.xpose.msra.mxu0 0.0
    %155 = vmatprep.mubr.f32.mxu0 0.0
    %156 = vmatmul.mubr.f32.gmra.mxu0 %v89
    %v157 = vpop.f32.mrf.mxu0
    %v158 = vadd.f32 0.0, %v157
    %v159 = vpop.f32.mrf.mxu0
    %160 = vdwg.mxu0
    %v162 = vsel %vm38, %v87, 0
    %164 = vmatprep.subr.mxu0 0.0
    %165 = vmatpush1.xpose.msra.mxu0 0.0
    %166 = vmatprep.subr.mxu0 0.0
    %167 = vmatpush1.xpose.msra.mxu0 0.0
    %168 = vmatprep.subr.mxu0 0.0
    %169 = vmatpush1.xpose.msra.mxu0 0.0
    %170 = vmatprep.subr.mxu0 0.0
    %171 = vmatpush1.xpose.msra.mxu0 0.0
    %172 = vmatprep.subr.mxu0 0.0
    %173 = vmatpush1.xpose.msra.mxu0 0.0
    %174 = vmatprep.subr.mxu0 0.0
    %175 = vmatpush1.xpose.msra.mxu0 0.0
    %176 = vmatprep.subr.mxu0 0.0
    %177 = vmatpush1.xpose.msra.mxu0 0.0
    %178 = vmatprep.subr.mxu0 0.0
    %179 = vmatpush1.xpose.msra.mxu0 0.0
    %180 = vmatprep.subr.mxu0 0.0
    %181 = vmatpush1.xpose.msra.mxu0 0.0
    %182 = vmatprep.subr.mxu0 0.0
    %183 = vmatpush1.xpose.msra.mxu0 0.0
    %184 = vmatprep.subr.mxu0 0.0
    %185 = vmatpush1.xpose.msra.mxu0 0.0
    %186 = vmatprep.subr.mxu0 0.0
    %187 = vmatpush1.xpose.msra.mxu0 0.0
    %188 = vmatprep.subr.mxu0 0.0
    %189 = vmatpush1.xpose.msra.mxu0 0.0
    %190 = vmatprep.subr.mxu0 0.0
    %191 = vmatpush1.xpose.msra.mxu0 0.0
    %192 = vmatprep.subr.mxu0 0.0
    %193 = vmatpush1.xpose.msra.mxu0 0.0
    %194 = vmatprep.subr.mxu0 0.0
    %195 = vmatpush1.xpose.msra.mxu0 %v162
    %196 = vmatprep.subr.mxu0 0.0
    %197 = vmatpush2.xpose.msra.mxu0 0.0
    %198 = vmatprep.subr.mxu0 0.0
    %199 = vmatpush2.xpose.msra.mxu0 0.0
    %200 = vmatprep.subr.mxu0 0.0
    %201 = vmatpush2.xpose.msra.mxu0 0.0
    %202 = vmatprep.subr.mxu0 0.0
    %203 = vmatpush2.xpose.msra.mxu0 0.0
    %204 = vmatprep.subr.mxu0 0.0
    %205 = vmatpush2.xpose.msra.mxu0 0.0
    %206 = vmatprep.subr.mxu0 0.0
    %207 = vmatpush2.xpose.msra.mxu0 0.0
    %208 = vmatprep.subr.mxu0 0.0
    %209 = vmatpush2.xpose.msra.mxu0 0.0
    %210 = vmatprep.subr.mxu0 0.0
    %211 = vmatpush2.xpose.msra.mxu0 0.0
    %212 = vmatprep.subr.mxu0 0.0
    %213 = vmatpush2.xpose.msra.mxu0 0.0
    %214 = vmatprep.subr.mxu0 0.0
    %215 = vmatpush2.xpose.msra.mxu0 0.0
    %216 = vmatprep.subr.mxu0 0.0
    %217 = vmatpush2.xpose.msra.mxu0 0.0
    %218 = vmatprep.subr.mxu0 0.0
    %219 = vmatpush2.xpose.msra.mxu0 0.0
    %220 = vmatprep.subr.mxu0 0.0
    %221 = vmatpush2.xpose.msra.mxu0 0.0
    %222 = vmatprep.subr.mxu0 0.0
    %223 = vmatpush2.xpose.msra.mxu0 0.0
    %224 = vmatprep.subr.mxu0 0.0
    %225 = vmatpush2.xpose.msra.mxu0 0.0
    %226 = vmatprep.subr.mxu0 0.0
    %227 = vmatpush2.xpose.msra.mxu0 0.0
    %228 = vmatprep.mubr.f32.mxu0 0.0
    %229 = vmatmul.mubr.f32.gmra.mxu0 %v162
    %v230 = vpop.f32.mrf.mxu0
    %v231 = vadd.f32 0.0, %v230
    %v232 = vpop.f32.mrf.mxu0
    %233 = vdwg.mxu0
    %v234 = vmul.f32 %v158, %v231
    %vm235 = vcmask 64512
    %v236 = vsel %vm235, %v234, 0.0
    %237 = vadd.xlane.f32.xlu0 %v236
    %v238 = vpop.xlane.xlu0 %237
    %v239 = vrot.slane %v238, 4
    %v240 = vadd.f32 %v238, %v239
    %v241 = vrot.slane %v240, 2
    %v242 = vadd.f32 %v240, %v241
    %v243 = vrot.slane %v242, 1
    %v244 = vadd.f32 %v242, %v243
    %s245 = vtos %v244
    %v246 = vrcp.pop 1024.0
    %s247 = vtos %v246
    %s248 = smul.f32 %s245, %s247
    %s249 = smul.f32 %s248, 0.01
    %s250 = smax.f32 %s249, 0.0
    %s251 = scalar_lea.smem [#allocation7], 0
    %252 = sst [smem:[%s251]] %s250
    // Predicated region
    $region18: #{tpu_custom_call.1} parent=1 // pred_check
      _
    $region19: #{tpu_custom_call.1} parent=1 // pred_check_branch
      %254 = sbr.rel (0) target = $region21
    $region20: #{tpu_custom_call.1} parent=1 // pred_region
      %s256 = ssub.s32 16, 16
      %257 = vsyncadd [#allocation4], %s256
      %260 = dma.smem_to_hbm [#allocation7], 16, %s2, [#allocation4]
    $region21: #{tpu_custom_call.1} parent=1 // pred_fallthru
      _
    // Predicated region
    $region22: #{tpu_custom_call.1} parent=1 // pred_check
      _
    $region23: #{tpu_custom_call.1} parent=1 // pred_check_branch
      %262 = sbr.rel (0) target = $region25
    $region24: #{tpu_custom_call.1} parent=1 // pred_region
      %263 = dma.done [#allocation4], 16
    $region25: #{tpu_custom_call.1} parent=1 // pred_fallthru
      _
    %264 = sfence
    %265 = vsyncpa [#allocation3], 1
    %266 = vsyncpa [#allocation6], 1
    %267 = vsyncpa [#allocation4], 1

</llo_original>
